<compile_context>
chip_gen: v6e
topology: v6e:2x2x1
jax: 0.10.0
libtpu: 0.0.40
codegen_flags: <defaults>
</compile_context>

<pallas_src>
import jax
import jax.numpy as jnp
from jax.experimental import pallas as pl
from jax.experimental.pallas import tpu as pltpu


def _gather_add_kernel(tok_ids_ref, pos_ids_ref,   # SMEM scalar-prefetch, (n_ids,) int32
                       tok_hbm,                    # HBM ref: (V, E) token table
                       pos_ref,                    # VMEM ref: (L, E) positional table
                       out_ref,                    # VMEM output block: (tile_n, E)
                       tok_buf,                    # VMEM scratch: (2 * tile_n, E)
                       sem):                       # DMA semaphores: (2,)
    tile_n = out_ref.shape[0]
    i = pl.program_id(0)
    num_tiles = pl.num_programs(0)
    slot = i % 2                      # scratch half holding THIS tile's rows

    def issue_tile(tile_idx, dst_slot):
        base = tile_idx * tile_n
        off = dst_slot * tile_n
        # One (1, E) row DMA per token id; all copies for a tile accumulate on
        # the slot's single semaphore and are all in flight concurrently.
        @pl.loop(0, tile_n)
        def _issue(r):
            tid = tok_ids_ref[base + r]
            pltpu.make_async_copy(tok_hbm.at[pl.ds(tid, 1), :],
                                  tok_buf.at[pl.ds(off + r, 1), :],
                                  sem.at[dst_slot]).start()

    # Prime the pipeline: the very first step must gather its own tile.
    @pl.when(i == 0)
    def _prime():
        issue_tile(0, 0)

    # Cross-step prefetch: start the NEXT tile's gather into the other slot
    # before draining the current one, hiding the gather latency behind this
    # step's wait/add and the output writeback.
    @pl.when(i + 1 < num_tiles)
    def _prefetch():
        issue_tile(i + 1, (i + 1) % 2)

    # Drain this tile's token-row DMAs.  The wait descriptor only needs the
    # copy shape + semaphore, so use a fixed source slice (no SMEM id
    # re-reads interleaved with .wait()).
    off = slot * tile_n
    @pl.loop(0, tile_n)
    def _wait(r):
        pltpu.make_async_copy(tok_hbm.at[pl.ds(0, 1), :],
                              tok_buf.at[pl.ds(off + r, 1), :],
                              sem.at[slot]).wait()

    # token_embeddings + position_embeddings: positional rows are gathered
    # from the VMEM-resident table with dynamic-offset loads (no HBM DMA).
    base = i * tile_n
    @pl.loop(0, tile_n)
    def _add(r):
        sid = pos_ids_ref[base + r]
        out_ref[pl.ds(r, 1), :] = (tok_buf[pl.ds(off + r, 1), :] +
                                   pos_ref[pl.ds(sid, 1), :])


def _round_up(x, m):
    return ((x + m - 1) // m) * m


def gpt1_embedding(tokens, positions, tok_table, pos_table, *,
                   tile_n=256, validate=False):
    """GPT-1 embedding forward.

    tokens, positions: (B, S) integer arrays.
    tok_table: (V, E) float table (row 0 assumed zeroed for padding_idx=0).
    pos_table: (L, E) float table.
    Returns (B, S, E) = tok_table[tokens] + pos_table[positions].
    """
    V, E = tok_table.shape
    L, Ep = pos_table.shape
    assert E == Ep, "token/position embedding sizes must match"
    B, S = tokens.shape
    N = B * S

    pos_table = pos_table.astype(tok_table.dtype)

    if validate:
        # Debug-only (eager): mirrors the torch RuntimeErrors.  Forces a
        # device->host sync and cannot run under jit; the jit-safe default
        # path clamps ids instead (documented semantic divergence).
        if bool(jnp.any(positions >= L)):
            raise RuntimeError(
                "Some position indices are larger than the maximum sequence length.")
        if bool(jnp.any(tokens >= V)):
            raise RuntimeError(
                "Some tokens are larger than the size of the vocabulary.")

    # Row tile: multiple of 8, large by default (256) to amortize per-step
    # overhead and keep many row DMAs in flight; clamped to the problem size.
    tile_n = max(8, (int(tile_n) // 8) * 8)
    tile_n = min(tile_n, _round_up(N, 8))
    num_tiles = pl.cdiv(N, tile_n)
    n_ids = num_tiles * tile_n

    # Flatten + clamp ids (clamping guarantees every DMA stays in bounds, as
    # with nn.Embedding the caller is responsible for id validity).
    tok_ids = jnp.clip(tokens.reshape(N).astype(jnp.int32), 0, V - 1)
    pos_ids = jnp.clip(positions.reshape(N).astype(jnp.int32), 0, L - 1)
    if n_ids != N:   # pad only the SMEM id arrays, never the HBM output
        tok_ids = jnp.pad(tok_ids, (0, n_ids - N))
        pos_ids = jnp.pad(pos_ids, (0, n_ids - N))

    itemsize = jnp.dtype(tok_table.dtype).itemsize
    vmem_needed = (2 * tile_n * E      # double-buffered token-row gather scratch
                   + 2 * tile_n * E    # Pallas-double-buffered output block
                   + 2 * L * E         # resident positional table (+ spare buffer)
                   ) * itemsize + (2 << 20)
    vmem_limit = int(min(60 << 20, max(32 << 20, vmem_needed)))

    grid_spec = pltpu.PrefetchScalarGridSpec(
        num_scalar_prefetch=2,
        grid=(num_tiles,),
        in_specs=[
            pl.BlockSpec(memory_space=pl.ANY),                    # token table stays in HBM
            pl.BlockSpec((L, E), lambda i, tok, pos: (0, 0)),     # pos table: VMEM resident
        ],
        out_specs=pl.BlockSpec((tile_n, E), lambda i, tok, pos: (i, 0)),
        scratch_shapes=[
            pltpu.VMEM((2 * tile_n, E), tok_table.dtype),          # 2-slot token-row buffer
            pltpu.SemaphoreType.DMA((2,)),                         # one sem per slot
        ],
    )

    out = pl.pallas_call(
        _gather_add_kernel,
        out_shape=jax.ShapeDtypeStruct((N, E), tok_table.dtype),
        grid_spec=grid_spec,
        compiler_params=pltpu.CompilerParams(
            # "arbitrary": the cross-step gather prefetch carries scratch +
            # semaphore state between grid steps, so the axis must not be
            # sharded across TensorCores.
            dimension_semantics=("arbitrary",),
            vmem_limit_bytes=vmem_limit),
    )(tok_ids, pos_ids, tok_table, pos_table)

    return out.reshape(B, S, E)


if __name__ == "__main__":
    # Small config consistent with the module: vocab=16, embed=32, seq_len=8.
    vocabulary_size = 16
    embedding_size = 32
    sequence_length = 8
    batch_size = 2

    key = jax.random.PRNGKey(0)
    k_tok, k_pos, k_ids = jax.random.split(key, 3)

    # Deterministic parameter init (nn.Embedding default ~ N(0,1)); row 0 of
    # the token table is zeroed to honor padding_idx=0 initialization.
    tok_table = jax.random.normal(k_tok, (vocabulary_size, embedding_size),
                                  dtype=jnp.float32)
    tok_table = tok_table.at[0].set(0.0)
    pos_table = jax.random.normal(k_pos, (sequence_length, embedding_size),
                                  dtype=jnp.float32)

    tokens = jax.random.randint(k_ids, (batch_size, sequence_length),
                                0, vocabulary_size, dtype=jnp.int32)
    positions = jnp.broadcast_to(
        jnp.arange(sequence_length, dtype=jnp.int32)[None, :],
        (batch_size, sequence_length))

    fwd = jax.jit(gpt1_embedding)   # default path is jit-compatible (no host syncs)
    out = jax.block_until_ready(fwd(tokens, positions, tok_table, pos_table))

    # Pure-JAX reference check.
    ref = jnp.take(tok_table, tokens, axis=0) + jnp.take(pos_table, positions, axis=0)
    assert out.shape == (batch_size, sequence_length, embedding_size)
    assert out.dtype == jnp.float32
    assert jnp.allclose(out, ref, atol=1e-6, rtol=1e-6)

    print("KERNEL_OK")
</pallas_src>

<mosaic_0001>
module attributes {stable_mosaic.version = 11 : i64} {
  func.func @_gather_add_kernel(%arg0: i32, %arg1: memref<16xi32, #tpu.memory_space<smem>>, %arg2: memref<16xi32, #tpu.memory_space<smem>>, %arg3: memref<16x32xf32, #tpu.memory_space<any>>, %arg4: memref<8x32xf32, #tpu.memory_space<vmem>>, %arg5: memref<16x32xf32, #tpu.memory_space<vmem>>, %arg6: memref<32x32xf32, #tpu.memory_space<vmem>>, %arg7: memref<2x!tpu.dma_semaphore, #tpu.memory_space<semaphore_mem>>) attributes {dimension_semantics = [#tpu.dimension_semantics<arbitrary>], iteration_bounds = array<i64: 1>, scalar_prefetch = 2 : i64, scratch_operands = 2 : i64, tpu.core_type = #tpu.core_type<tc>, window_params = [{}, {pipeline_mode = #tpu.pipeline_mode<synchronous>, transform_indices = @transform_1, window_bounds = array<i64: 8, 32>}, {transform_indices = @transform_2, window_bounds = array<i64: 16, 32>}]} {
    %c2_i32 = arith.constant 2 : i32
    %c0_i32 = arith.constant 0 : i32
    %0 = arith.cmpi eq, %c2_i32, %c0_i32 : i32
    %c1_i32 = arith.constant 1 : i32
    %1 = arith.select %0, %c1_i32, %c2_i32 : i32
    %2 = arith.remsi %arg0, %1 : i32
    %c0_i32_0 = arith.constant 0 : i32
    %3 = arith.cmpi ne, %2, %c0_i32_0 : i32
    %c0_i32_1 = arith.constant 0 : i32
    %4 = arith.cmpi slt, %2, %c0_i32_1 : i32
    %c0_i32_2 = arith.constant 0 : i32
    %5 = arith.cmpi slt, %1, %c0_i32_2 : i32
    %6 = arith.xori %4, %5 : i1
    %7 = arith.andi %6, %3 : i1
    %8 = arith.addi %2, %1 : i32
    %9 = arith.select %7, %8, %2 : i32
    %c0_i32_3 = arith.constant 0 : i32
    %10 = arith.cmpi eq, %arg0, %c0_i32_3 : i32
    %11 = arith.extui %10 : i1 to i32
    %c0_i32_4 = arith.constant 0 : i32
    %12 = arith.cmpi ne, %11, %c0_i32_4 : i32
    scf.if %12 {
      %c0_i32_17 = arith.constant 0 : i32
      %c16_i32_18 = arith.constant 16 : i32
      %21 = arith.addi %c0_i32_17, %c16_i32_18 : i32
      %c1_i32_19 = arith.constant 1 : i32
      scf.for %arg8 = %c0_i32_17 to %21 step %c1_i32_19  : i32 {
        %c1_i32_21 = arith.constant 1 : i32
        %22 = arith.muli %arg8, %c1_i32_21 : i32
        %c0_i32_22 = arith.constant 0 : i32
        %23 = arith.addi %c0_i32_22, %22 : i32
        %c0_i32_23 = arith.constant 0 : i32
        %24 = arith.addi %c0_i32_23, %23 : i32
        %25 = arith.index_cast %24 : i32 to index
        %26 = memref.load %arg1[%25] : memref<16xi32, #tpu.memory_space<smem>>
        %c0_i32_24 = arith.constant 0 : i32
        %27 = arith.addi %c0_i32_24, %23 : i32
        %c0_i32_25 = arith.constant 0 : i32
        %c0_i32_26 = arith.constant 0 : i32
        %28 = tpu.memref_slice %arg3[%26, %c0_i32_26] : memref<16x32xf32, #tpu.memory_space<any>> -> memref<1x32xf32, #tpu.memory_space<any>>
        %c0_i32_27 = arith.constant 0 : i32
        %29 = tpu.memref_slice %arg6[%27, %c0_i32_27] : memref<32x32xf32, #tpu.memory_space<vmem>> -> memref<1x32xf32, #tpu.memory_space<vmem>>
        %30 = tpu.memref_slice %arg7[%c0_i32_25] : memref<2x!tpu.dma_semaphore, #tpu.memory_space<semaphore_mem>> -> memref<1x!tpu.dma_semaphore, #tpu.memory_space<semaphore_mem>>
        %31 = tpu.memref_squeeze %30 : memref<1x!tpu.dma_semaphore, #tpu.memory_space<semaphore_mem>> -> memref<!tpu.dma_semaphore, #tpu.memory_space<semaphore_mem>>
        tpu.enqueue_dma source(%28 : memref<1x32xf32, #tpu.memory_space<any>>) target(%29 : memref<1x32xf32, #tpu.memory_space<vmem>>) target_semaphore(%31 : memref<!tpu.dma_semaphore, #tpu.memory_space<semaphore_mem>>)
      }
      %c16_i32_20 = arith.constant 16 : i32
    } else {
    }
    %c1_i32_5 = arith.constant 1 : i32
    %13 = arith.addi %arg0, %c1_i32_5 : i32
    %c1_i32_6 = arith.constant 1 : i32
    %14 = arith.cmpi slt, %13, %c1_i32_6 : i32
    %15 = arith.extui %14 : i1 to i32
    %c0_i32_7 = arith.constant 0 : i32
    %16 = arith.cmpi ne, %15, %c0_i32_7 : i32
    scf.if %16 {
      %c1_i32_17 = arith.constant 1 : i32
      %21 = arith.addi %arg0, %c1_i32_17 : i32
      %c1_i32_18 = arith.constant 1 : i32
      %22 = arith.addi %arg0, %c1_i32_18 : i32
      %c2_i32_19 = arith.constant 2 : i32
      %c0_i32_20 = arith.constant 0 : i32
      %23 = arith.cmpi eq, %c2_i32_19, %c0_i32_20 : i32
      %c1_i32_21 = arith.constant 1 : i32
      %24 = arith.select %23, %c1_i32_21, %c2_i32_19 : i32
      %25 = arith.remsi %22, %24 : i32
      %c0_i32_22 = arith.constant 0 : i32
      %26 = arith.cmpi ne, %25, %c0_i32_22 : i32
      %c0_i32_23 = arith.constant 0 : i32
      %27 = arith.cmpi slt, %25, %c0_i32_23 : i32
      %c0_i32_24 = arith.constant 0 : i32
      %28 = arith.cmpi slt, %24, %c0_i32_24 : i32
      %29 = arith.xori %27, %28 : i1
      %30 = arith.andi %29, %26 : i1
      %31 = arith.addi %25, %24 : i32
      %32 = arith.select %30, %31, %25 : i32
      %c16_i32_25 = arith.constant 16 : i32
      %33 = arith.muli %21, %c16_i32_25 : i32
      %c16_i32_26 = arith.constant 16 : i32
      %34 = arith.muli %32, %c16_i32_26 : i32
      %c0_i32_27 = arith.constant 0 : i32
      %c16_i32_28 = arith.constant 16 : i32
      %35 = arith.addi %c0_i32_27, %c16_i32_28 : i32
      %c1_i32_29 = arith.constant 1 : i32
      scf.for %arg8 = %c0_i32_27 to %35 step %c1_i32_29  : i32 {
        %c1_i32_31 = arith.constant 1 : i32
        %36 = arith.muli %arg8, %c1_i32_31 : i32
        %c0_i32_32 = arith.constant 0 : i32
        %37 = arith.addi %c0_i32_32, %36 : i32
        %38 = arith.addi %33, %37 : i32
        %39 = arith.index_cast %38 : i32 to index
        %40 = memref.load %arg1[%39] : memref<16xi32, #tpu.memory_space<smem>>
        %41 = arith.addi %34, %37 : i32
        %c0_i32_33 = arith.constant 0 : i32
        %42 = tpu.memref_slice %arg3[%40, %c0_i32_33] : memref<16x32xf32, #tpu.memory_space<any>> -> memref<1x32xf32, #tpu.memory_space<any>>
        %c0_i32_34 = arith.constant 0 : i32
        %43 = tpu.memref_slice %arg6[%41, %c0_i32_34] : memref<32x32xf32, #tpu.memory_space<vmem>> -> memref<1x32xf32, #tpu.memory_space<vmem>>
        %44 = tpu.memref_slice %arg7[%32] : memref<2x!tpu.dma_semaphore, #tpu.memory_space<semaphore_mem>> -> memref<1x!tpu.dma_semaphore, #tpu.memory_space<semaphore_mem>>
        %45 = tpu.memref_squeeze %44 : memref<1x!tpu.dma_semaphore, #tpu.memory_space<semaphore_mem>> -> memref<!tpu.dma_semaphore, #tpu.memory_space<semaphore_mem>>
        tpu.enqueue_dma source(%42 : memref<1x32xf32, #tpu.memory_space<any>>) target(%43 : memref<1x32xf32, #tpu.memory_space<vmem>>) target_semaphore(%45 : memref<!tpu.dma_semaphore, #tpu.memory_space<semaphore_mem>>)
      }
      %c16_i32_30 = arith.constant 16 : i32
    } else {
    }
    %c16_i32 = arith.constant 16 : i32
    %17 = arith.muli %9, %c16_i32 : i32
    %c0_i32_8 = arith.constant 0 : i32
    %c16_i32_9 = arith.constant 16 : i32
    %18 = arith.addi %c0_i32_8, %c16_i32_9 : i32
    %c1_i32_10 = arith.constant 1 : i32
    scf.for %arg8 = %c0_i32_8 to %18 step %c1_i32_10  : i32 {
      %c1_i32_17 = arith.constant 1 : i32
      %21 = arith.muli %arg8, %c1_i32_17 : i32
      %c0_i32_18 = arith.constant 0 : i32
      %22 = arith.addi %c0_i32_18, %21 : i32
      %23 = arith.addi %17, %22 : i32
      %c0_i32_19 = arith.constant 0 : i32
      %c0_i32_20 = arith.constant 0 : i32
      %24 = tpu.memref_slice %arg3[%c0_i32_19, %c0_i32_20] : memref<16x32xf32, #tpu.memory_space<any>> -> memref<1x32xf32, #tpu.memory_space<any>>
      %c0_i32_21 = arith.constant 0 : i32
      %25 = tpu.memref_slice %arg6[%23, %c0_i32_21] : memref<32x32xf32, #tpu.memory_space<vmem>> -> memref<1x32xf32, #tpu.memory_space<vmem>>
      %26 = tpu.memref_slice %arg7[%9] : memref<2x!tpu.dma_semaphore, #tpu.memory_space<semaphore_mem>> -> memref<1x!tpu.dma_semaphore, #tpu.memory_space<semaphore_mem>>
      %27 = tpu.memref_squeeze %26 : memref<1x!tpu.dma_semaphore, #tpu.memory_space<semaphore_mem>> -> memref<!tpu.dma_semaphore, #tpu.memory_space<semaphore_mem>>
      tpu.wait_dma2 semaphore(%27 : memref<!tpu.dma_semaphore, #tpu.memory_space<semaphore_mem>>) src(%24 : memref<1x32xf32, #tpu.memory_space<any>>) dst(%25 : memref<1x32xf32, #tpu.memory_space<vmem>>)
    }
    %c16_i32_11 = arith.constant 16 : i32
    %c16_i32_12 = arith.constant 16 : i32
    %19 = arith.muli %arg0, %c16_i32_12 : i32
    %c0_i32_13 = arith.constant 0 : i32
    %c16_i32_14 = arith.constant 16 : i32
    %20 = arith.addi %c0_i32_13, %c16_i32_14 : i32
    %c1_i32_15 = arith.constant 1 : i32
    scf.for %arg8 = %c0_i32_13 to %20 step %c1_i32_15  : i32 {
      %c1_i32_17 = arith.constant 1 : i32
      %21 = arith.muli %arg8, %c1_i32_17 : i32
      %c0_i32_18 = arith.constant 0 : i32
      %22 = arith.addi %c0_i32_18, %21 : i32
      %23 = arith.addi %19, %22 : i32
      %24 = arith.index_cast %23 : i32 to index
      %25 = memref.load %arg2[%24] : memref<16xi32, #tpu.memory_space<smem>>
      %26 = arith.addi %17, %22 : i32
      %27 = arith.index_cast %26 : i32 to index
      %c0 = arith.constant 0 : index
      %28 = vector.load %arg6[%27, %c0] : memref<32x32xf32, #tpu.memory_space<vmem>>, vector<1x32xf32>
      %29 = arith.index_cast %25 : i32 to index
      %c0_19 = arith.constant 0 : index
      %30 = vector.load %arg4[%29, %c0_19] : memref<8x32xf32, #tpu.memory_space<vmem>>, vector<1x32xf32>
      %31 = arith.addf %28, %30 : vector<1x32xf32>
      %32 = arith.index_cast %22 : i32 to index
      %c0_20 = arith.constant 0 : index
      %33 = vector.load %arg5[%32, %c0_20] : memref<16x32xf32, #tpu.memory_space<vmem>>, vector<1x32xf32>
      tpu.vector_store %arg5[%32, %c0_20], %31 {strides = array<i32>} : memref<16x32xf32, #tpu.memory_space<vmem>>, vector<1x32xf32>,
    }
    %c16_i32_16 = arith.constant 16 : i32
    return
  }
  func.func @transform_1(%arg0: i32, %arg1: memref<16xi32, #tpu.memory_space<smem>>, %arg2: memref<16xi32, #tpu.memory_space<smem>>) -> (i32, i32) {
    %c0_i32 = arith.constant 0 : i32
    %c0_i32_0 = arith.constant 0 : i32
    %c0_i32_1 = arith.constant 0 : i32
    return %c0_i32, %c0_i32_0 : i32, i32
  }
  func.func @transform_2(%arg0: i32, %arg1: memref<16xi32, #tpu.memory_space<smem>>, %arg2: memref<16xi32, #tpu.memory_space<smem>>) -> (i32, i32) {
    %c0_i32 = arith.constant 0 : i32
    %c0_i32_0 = arith.constant 0 : i32
    return %arg0, %c0_i32 : i32, i32
  }
}

</mosaic_0001>

<llo_original>
// kernel: gpt1_embedding.1
$region0: #{gpt1_embedding.1}
  #allocation0 [shape = 'u32[]', space=smem, size = 0x4, offset = 0x4, fixed_abs, tag = 'smem constant byte address 0x4 - core index']
  #allocation1 [shape = 'u32[144,128]{1,0:T(1,128)}', space=vmem, size = 0x12000, scoped, tag = 'internal scratch']
  #allocation2 [shape = 'f32[32,32]{1,0:T(8,128)}', space=vmem, size = 0x4000, scoped, tag = 'scratch operand']
  #allocation3 [shape = 's32[2]{0}', space=sflag, size = 0x8, scoped, tag = 'scratch operand']
  #allocation4 [shape = 's32[1]{0}', space=sflag, size = 0x4, scoped, tag = 'scoped memory for gpt1_embedding.1']
  #allocation5 [shape = 'u8[512]{0}', space=smem, size = 0x200, scoped, tag = 'prefetched SMEM operand 0']
  #allocation6 [shape = 'u8[512]{0}', space=smem, size = 0x200, scoped, tag = 'prefetched SMEM operand 1']
  #allocation11 [shape = 's32[]', space=sflag, size = 0x4, offset = 0, fixed_abs, tag = 'sflag constant byte address 0x0 - dummy sync flag']
  #allocation12 [shape = 's32[]', space=sflag, size = 0x4, offset = 0, fixed_abs, tag = 'sflag constant byte address 0x0 - dummy sync flag']
  %s0 = inlined_call_operand.vmem [shape: s32[16], index: 0, kind: input, shape index: {}]
  %s1 = inlined_call_operand.vmem [shape: s32[16], index: 1, kind: input, shape index: {}]
  %s2 = inlined_call_operand.vmem [shape: f32[16,32], index: 2, kind: input, shape index: {}]
  %s3 = inlined_call_operand.hbm [shape: f32[8,32], index: 3, kind: input, shape index: {}]
  %s4 = inlined_call_operand.hbm [shape: f32[16,32], index: 4, kind: output, shape index: {}]
  %s5 = sld [smem:[#allocation0]]
  $region114: #{gpt1_embedding.1} parent=0
    _
  %s7 = ssub.s32 1, %s5
  %s8 = scalar_select 0, %s7, %s5
  %s9 = sshll.u32 %s0, 4
  %s10 = int_to_ptr.vmem [resolvable:$true] %s9
  %12 = dma.vmem_to_smem %s10, 16, [#allocation5], [#allocation4]
  %s13 = sshll.u32 %s1, 4
  %s14 = int_to_ptr.vmem [resolvable:$true] %s13
  %16 = dma.vmem_to_smem %s14, 16, [#allocation6], [#allocation4]
  %17 = dma.done [#allocation4], 32
  %18 = sfence
  $region1: #{gpt1_embedding.1} parent=0
    #allocation7 [shape = 'u8[4096]{0}', space=vmem, size = 0x1000, scoped, tag = 'input window, operand 3, single buffered']
    #allocation8 [shape = 's32[1]{0}', space=sflag, size = 0x4, scoped, tag = 'scoped memory for gpt1_embedding.1']
    #allocation9 [shape = 's32[1]{0}', space=sflag, size = 0x4, scoped, tag = 'scoped memory for gpt1_embedding.1']
    #allocation10 [shape = 'u8[8192]{0}', space=vmem, size = 0x2000, scoped, tag = 'output window, operand 0, single buffered']
    %19 = vsyncpa [#allocation8], 0
    %20 = vsyncpa [#allocation9], 0
    // Predicated region
    $region2: #{gpt1_embedding.1} parent=1 // pred_check
      _
    $region3: #{gpt1_embedding.1} parent=1 // pred_check_branch
      %22 = sbr.rel (0) target = $region5
    $region4: #{gpt1_embedding.1} parent=1 // pred_region
      %s24 = ssub.s32 128, 128
      %25 = vsyncadd [#allocation8], %s24
      %s27 = sshll.u32 [#allocation7], 4
      %s28 = int_to_ptr.vmem [resolvable:$true] %s27
      %30 = dma.hbm_to_vmem [thread:$0]  %s3, 128, %s28, [#allocation8]
    $region5: #{gpt1_embedding.1} parent=1 // pred_fallthru
      _
    // Predicated region
    $region6: #{gpt1_embedding.1} parent=1 // pred_check
      _
    $region7: #{gpt1_embedding.1} parent=1 // pred_check_branch
      %32 = sbr.rel (0) target = $region9
    $region8: #{gpt1_embedding.1} parent=1 // pred_region
      %33 = dma.done [#allocation8], 128
    $region9: #{gpt1_embedding.1} parent=1 // pred_fallthru
      _
    %s34 = ssub.s32 0, 0
    %s35 = ssub.s32 0, 0
    %p36 = scmp.ne.s32.totalorder 0, 0
    %p37 = scmp.lt.s32.totalorder 0, 0
    %p38 = pnand %p37, %p36
    %p39 = pneg %p38
    %s40 = sadd.s32 0, 2
    %s41 = scalar_select %p39, %s40, 0
    %p42 = scmp.eq.s32.totalorder 0, 0
    // Predicated region
    $region10: #{gpt1_embedding.1} parent=1 // pred_check
      %p43 = pneg %p42
    $region11: #{gpt1_embedding.1} parent=1 // pred_check_branch
      %45 = sbr.rel (%p43) target = $region13
    $region12: #{gpt1_embedding.1} parent=1 // pred_region
      loop: start=0, step=1, limit=16
      $region14: #{gpt1_embedding.1} parent=12 // loop_pre_header
        _
      $region15: #{gpt1_embedding.1} parent=12 // loop_header
        %s47 = sphi 0, %s51
        %p48 = scmp.ge.s32.totalorder %s47, 16
      $region16: #{gpt1_embedding.1} parent=12 // loop_header_branch
        %50 = sbr.rel (%p48) target = $region20
      $region17: #{gpt1_embedding.1} parent=12 // loop_body
        %s52 = sld [smem:[#allocation5 + %s47]]
        %s53 = scalar_lea.vmem %s2, %s52
        %s54 = scalar_lea.vmem [#allocation2], %s47
        %p56 = scmp.lt.u32.totalorder 1, 8
        %p57 = pneg %p56
        // Predicated region
        $region21: #{gpt1_embedding.1} parent=17 // pred_check
          _
        $region22: #{gpt1_embedding.1} parent=17 // pred_check_branch
          %59 = sbr.rel (%p56) target = $region24
        $region23: #{gpt1_embedding.1} parent=17 // pred_region
          %s75 = sand.u32 1, 7
          %p76 = scmp.eq.s32.totalorder %s75, 0
          %p77 = pneg %p76
          // Predicated region
          $region36: #{gpt1_embedding.1} parent=23 // pred_check
            _
          $region37: #{gpt1_embedding.1} parent=23 // pred_check_branch
            %79 = sbr.rel (%p76) target = $region39
          $region38: #{gpt1_embedding.1} parent=23 // pred_region
            %s80 = sand.u32 1, 7
            %s81 = ssub.s32 1, %s80
            %s82 = scalar_lea.vmem %s53, %s81
            %s83 = ssub.s32 1, %s80
            %s84 = scalar_lea.vmem %s54, %s83 [#allocation2]
            %s85 = sshll.u32 1, %s80
            %s86 = ssub.s32 %s85, 1
            loop: start=0, step=1, limit=1
            $region40: #{gpt1_embedding.1} parent=38 // loop_pre_header
              _
            $region41: #{gpt1_embedding.1} parent=38 // loop_header
              %s88 = sphi 0, %s92
              %p89 = scmp.ge.s32.totalorder %s88, 1
              %s93 = sphi %s82, %s82
              %s94 = sphi %s84, %s84
            $region42: #{gpt1_embedding.1} parent=38 // loop_header_branch
              %91 = sbr.rel (%p89) target = $region46
            $region43: #{gpt1_embedding.1} parent=38 // loop_body
              %v95 = vld [vmem:[%s93] sm:%s86]
              %96 = vst [vmem:[%s94] sm:%s86] %v95
            $region44: #{gpt1_embedding.1} parent=38 // loop_footer
              %s92 = sadd.s32 1, %s88
            $region45: #{gpt1_embedding.1} parent=38 // loop_footer_branch
              %87 = sbr.rel target = $region41
            $region46: #{gpt1_embedding.1} parent=38 // loop_exit
              _
          $region39: #{gpt1_embedding.1} parent=23 // pred_fallthru
            _
        $region24: #{gpt1_embedding.1} parent=17 // pred_fallthru
          _
        // Predicated region
        $region25: #{gpt1_embedding.1} parent=17 // pred_check
          %p60 = pneg %p56
        $region26: #{gpt1_embedding.1} parent=17 // pred_check_branch
          %62 = sbr.rel (%p60) target = $region28
        $region27: #{gpt1_embedding.1} parent=17 // pred_region
          %s63 = sshll.u32 1, 1
          %s64 = ssub.s32 %s63, 1
          loop: start=0, step=1, limit=1
          $region29: #{gpt1_embedding.1} parent=27 // loop_pre_header
            _
          $region30: #{gpt1_embedding.1} parent=27 // loop_header
            %s66 = sphi 0, %s70
            %p67 = scmp.ge.s32.totalorder %s66, 1
            %s71 = sphi %s53, %s53
            %s72 = sphi %s54, %s54
          $region31: #{gpt1_embedding.1} parent=27 // loop_header_branch
            %69 = sbr.rel (%p67) target = $region35
          $region32: #{gpt1_embedding.1} parent=27 // loop_body
            %v73 = vld [vmem:[%s71] sm:%s64]
            %74 = vst [vmem:[%s72] sm:%s64] %v73
          $region33: #{gpt1_embedding.1} parent=27 // loop_footer
            %s70 = sadd.s32 1, %s66
          $region34: #{gpt1_embedding.1} parent=27 // loop_footer_branch
            %65 = sbr.rel target = $region30
          $region35: #{gpt1_embedding.1} parent=27 // loop_exit
            _
        $region28: #{gpt1_embedding.1} parent=17 // pred_fallthru
          _
        // Predicated region
        $region47: #{gpt1_embedding.1} parent=17 // pred_check
          _
        $region48: #{gpt1_embedding.1} parent=17 // pred_check_branch
          %99 = sbr.rel (0) target = $region50
        $region49: #{gpt1_embedding.1} parent=17 // pred_region
          %100 = vsyncadd [#allocation3], 16
        $region50: #{gpt1_embedding.1} parent=17 // pred_fallthru
          _
      $region18: #{gpt1_embedding.1} parent=12 // loop_footer
        %s51 = sadd.s32 1, %s47
      $region19: #{gpt1_embedding.1} parent=12 // loop_footer_branch
        %46 = sbr.rel target = $region15
      $region20: #{gpt1_embedding.1} parent=12 // loop_exit
        _
    $region13: #{gpt1_embedding.1} parent=1 // pred_fallthru
      _
    %s101 = sadd.s32 0, 1
    %p102 = scmp.lt.s32.totalorder %s101, 1
    // Predicated region
    $region51: #{gpt1_embedding.1} parent=1 // pred_check
      %p103 = pneg %p102
    $region52: #{gpt1_embedding.1} parent=1 // pred_check_branch
      %105 = sbr.rel (%p103) target = $region54
    $region53: #{gpt1_embedding.1} parent=1 // pred_region
      %p106 = scmp.lt.s32.totalorder %s101, 0
      %s107 = ssub.s32 0, %s101
      %s108 = scalar_select %p106, %s107, %s101
      %s109 = sand.u32 %s108, 1
      %s110 = ssub.s32 0, %s109
      %s111 = scalar_select %p106, %s110, %s109
      %p112 = scmp.ne.s32.totalorder %s111, 0
      %p113 = scmp.lt.s32.totalorder %s111, 0
      %p114 = pnand %p113, %p112
      %p115 = pneg %p114
      %s116 = sadd.s32 %s111, 2
      %s117 = scalar_select %p115, %s116, %s111
      %s118 = smul.u32 %s101, 16
      %s119 = smul.u32 %s117, 16
      loop: start=0, step=1, limit=16
      $region55: #{gpt1_embedding.1} parent=53 // loop_pre_header
        _
      $region56: #{gpt1_embedding.1} parent=53 // loop_header
        %s121 = sphi 0, %s125
        %p122 = scmp.ge.s32.totalorder %s121, 16
      $region57: #{gpt1_embedding.1} parent=53 // loop_header_branch
        %124 = sbr.rel (%p122) target = $region61
      $region58: #{gpt1_embedding.1} parent=53 // loop_body
        %s126 = sadd.s32 %s118, %s121
        %s127 = sld [smem:[#allocation5 + %s126]]
        %s128 = sadd.s32 %s119, %s121
        %s129 = scalar_lea.vmem %s2, %s127
        %s130 = scalar_lea.vmem [#allocation2], %s128
        %s131 = scalar_lea.sflag [#allocation3], %s117
        %p133 = scmp.lt.u32.totalorder 1, 8
        %p134 = pneg %p133
        // Predicated region
        $region62: #{gpt1_embedding.1} parent=58 // pred_check
          _
        $region63: #{gpt1_embedding.1} parent=58 // pred_check_branch
          %136 = sbr.rel (%p133) target = $region65
        $region64: #{gpt1_embedding.1} parent=58 // pred_region
          %s152 = sand.u32 1, 7
          %p153 = scmp.eq.s32.totalorder %s152, 0
          %p154 = pneg %p153
          // Predicated region
          $region77: #{gpt1_embedding.1} parent=64 // pred_check
            _
          $region78: #{gpt1_embedding.1} parent=64 // pred_check_branch
            %156 = sbr.rel (%p153) target = $region80
          $region79: #{gpt1_embedding.1} parent=64 // pred_region
            %s157 = sand.u32 1, 7
            %s158 = ssub.s32 1, %s157
            %s159 = scalar_lea.vmem %s129, %s158
            %s160 = ssub.s32 1, %s157
            %s161 = scalar_lea.vmem %s130, %s160 [#allocation2]
            %s162 = sshll.u32 1, %s157
            %s163 = ssub.s32 %s162, 1
            loop: start=0, step=1, limit=1
            $region81: #{gpt1_embedding.1} parent=79 // loop_pre_header
              _
            $region82: #{gpt1_embedding.1} parent=79 // loop_header
              %s165 = sphi 0, %s169
              %p166 = scmp.ge.s32.totalorder %s165, 1
              %s170 = sphi %s159, %s159
              %s171 = sphi %s161, %s161
            $region83: #{gpt1_embedding.1} parent=79 // loop_header_branch
              %168 = sbr.rel (%p166) target = $region87
            $region84: #{gpt1_embedding.1} parent=79 // loop_body
              %v172 = vld [vmem:[%s170] sm:%s163]
              %173 = vst [vmem:[%s171] sm:%s163] %v172
            $region85: #{gpt1_embedding.1} parent=79 // loop_footer
              %s169 = sadd.s32 1, %s165
            $region86: #{gpt1_embedding.1} parent=79 // loop_footer_branch
              %164 = sbr.rel target = $region82
            $region87: #{gpt1_embedding.1} parent=79 // loop_exit
              _
          $region80: #{gpt1_embedding.1} parent=64 // pred_fallthru
            _
        $region65: #{gpt1_embedding.1} parent=58 // pred_fallthru
          _
        // Predicated region
        $region66: #{gpt1_embedding.1} parent=58 // pred_check
          %p137 = pneg %p133
        $region67: #{gpt1_embedding.1} parent=58 // pred_check_branch
          %139 = sbr.rel (%p137) target = $region69
        $region68: #{gpt1_embedding.1} parent=58 // pred_region
          %s140 = sshll.u32 1, 1
          %s141 = ssub.s32 %s140, 1
          loop: start=0, step=1, limit=1
          $region70: #{gpt1_embedding.1} parent=68 // loop_pre_header
            _
          $region71: #{gpt1_embedding.1} parent=68 // loop_header
            %s143 = sphi 0, %s147
            %p144 = scmp.ge.s32.totalorder %s143, 1
            %s148 = sphi %s129, %s129
            %s149 = sphi %s130, %s130
          $region72: #{gpt1_embedding.1} parent=68 // loop_header_branch
            %146 = sbr.rel (%p144) target = $region76
          $region73: #{gpt1_embedding.1} parent=68 // loop_body
            %v150 = vld [vmem:[%s148] sm:%s141]
            %151 = vst [vmem:[%s149] sm:%s141] %v150
          $region74: #{gpt1_embedding.1} parent=68 // loop_footer
            %s147 = sadd.s32 1, %s143
          $region75: #{gpt1_embedding.1} parent=68 // loop_footer_branch
            %142 = sbr.rel target = $region71
          $region76: #{gpt1_embedding.1} parent=68 // loop_exit
            _
        $region69: #{gpt1_embedding.1} parent=58 // pred_fallthru
          _
        // Predicated region
        $region88: #{gpt1_embedding.1} parent=58 // pred_check
          _
        $region89: #{gpt1_embedding.1} parent=58 // pred_check_branch
          %176 = sbr.rel (0) target = $region91
        $region90: #{gpt1_embedding.1} parent=58 // pred_region
          %177 = vsyncadd %s131, 16
        $region91: #{gpt1_embedding.1} parent=58 // pred_fallthru
          _
      $region59: #{gpt1_embedding.1} parent=53 // loop_footer
        %s125 = sadd.s32 1, %s121
      $region60: #{gpt1_embedding.1} parent=53 // loop_footer_branch
        %120 = sbr.rel target = $region56
      $region61: #{gpt1_embedding.1} parent=53 // loop_exit
        _
    $region54: #{gpt1_embedding.1} parent=1 // pred_fallthru
      _
    %s178 = smul.u32 %s41, 16
    loop: start=0, step=1, limit=16
    $region92: #{gpt1_embedding.1} parent=1 // loop_pre_header
      _
    $region93: #{gpt1_embedding.1} parent=1 // loop_header
      %s180 = sphi 0, %s184
      %p181 = scmp.ge.s32.totalorder %s180, 16
    $region94: #{gpt1_embedding.1} parent=1 // loop_header_branch
      %183 = sbr.rel (%p181) target = $region98
    $region95: #{gpt1_embedding.1} parent=1 // loop_body
      %s185 = scalar_lea.sflag [#allocation3], %s41
      %s186 = smul.u32 1, 1
      %s187 = sshll.u32 %s186, 4
      %188 = dma.done %s185, %s187
    $region96: #{gpt1_embedding.1} parent=1 // loop_footer
      %s184 = sadd.s32 1, %s180
    $region97: #{gpt1_embedding.1} parent=1 // loop_footer_branch
      %179 = sbr.rel target = $region93
    $region98: #{gpt1_embedding.1} parent=1 // loop_exit
      _
    %s189 = smul.u32 0, 16
    loop: start=0, step=1, limit=16
    $region99: #{gpt1_embedding.1} parent=1 // loop_pre_header
      _
    $region100: #{gpt1_embedding.1} parent=1 // loop_header
      %s191 = sphi 0, %s195
      %p192 = scmp.ge.s32.totalorder %s191, 16
    $region101: #{gpt1_embedding.1} parent=1 // loop_header_branch
      %194 = sbr.rel (%p192) target = $region105
    $region102: #{gpt1_embedding.1} parent=1 // loop_body
      %s196 = sadd.s32 %s189, %s191
      %s197 = sld [smem:[#allocation6 + %s196]]
      %s198 = sadd.s32 %s178, %s191
      %s199 = scalar_lea.vmem [#allocation2], %s198
      %v200 = vld [vmem:[%s199] sm:$0x1]
      %s201 = scalar_lea.vmem [#allocation7], %s197
      %v202 = vld [vmem:[%s201] sm:$0x1]
      %v203 = vadd.f32 %v200, %v202
      %s204 = scalar_lea.vmem [#allocation10], %s191
      %vm205 = vcmask 253952
      %206 = vst.msk [vmem:[%s204] sm:$0x1] %vm205, %v203
    $region103: #{gpt1_embedding.1} parent=1 // loop_footer
      %s195 = sadd.s32 1, %s191
    $region104: #{gpt1_embedding.1} parent=1 // loop_footer_branch
      %190 = sbr.rel target = $region100
    $region105: #{gpt1_embedding.1} parent=1 // loop_exit
      _
    // Predicated region
    $region106: #{gpt1_embedding.1} parent=1 // pred_check
      _
    $region107: #{gpt1_embedding.1} parent=1 // pred_check_branch
      %208 = sbr.rel (0) target = $region109
    $region108: #{gpt1_embedding.1} parent=1 // pred_region
      %s210 = ssub.s32 256, 256
      %211 = vsyncadd [#allocation9], %s210
      %s212 = sshll.u32 [#allocation10], 4
      %s213 = int_to_ptr.vmem [resolvable:$true] %s212
      %218 = dma.vmem_to_hbm [thread:$0]  %s213, 256, %s4, [#allocation9], 128, 128, 8
    $region109: #{gpt1_embedding.1} parent=1 // pred_fallthru
      _
    // Predicated region
    $region110: #{gpt1_embedding.1} parent=1 // pred_check
      _
    $region111: #{gpt1_embedding.1} parent=1 // pred_check_branch
      %220 = sbr.rel (0) target = $region113
    $region112: #{gpt1_embedding.1} parent=1 // pred_region
      %221 = dma.done [#allocation9], 256
    $region113: #{gpt1_embedding.1} parent=1 // pred_fallthru
      _
    %222 = vsyncpa [#allocation8], 1
    %223 = vsyncpa [#allocation9], 1
  %224 = vsyncmov [#allocation3]
  %s225 = vpop.sfrf %224
  %p226 = scmp.eq.s32.totalorder %s225, 0
  %p227 = pneg %p226
  %229 = shalt.err (%p227)
  %s230 = scalar_lea.sflag [#allocation3], 1
  %231 = vsyncmov %s230
  %s232 = vpop.sfrf %231
  %p233 = scmp.eq.s32.totalorder %s232, 0
  %p234 = pneg %p233
  %236 = shalt.err (%p234)

</llo_original>
